<compile_context>
chip_gen: v6e
topology: v6e:2x2x1
jax: 0.10.0
libtpu: 0.0.40
codegen_flags: <defaults>
</compile_context>

<pallas_src>
import jax
import jax.numpy as jnp
from jax import lax
from jax.experimental import pallas as pl
from jax.experimental.pallas import tpu as pltpu


# ----------------------------------------------------------------------------
# Pallas kernel: fused (Cout,K)@(K,TM) matmul + folded-BN shift + ReLU
# ----------------------------------------------------------------------------
def _conv_bn_relu_kernel(w_ref, p_ref, shift_ref, o_ref):
    # w_ref:     (Cout, Kp)  bf16, BN scale folded in (VMEM-resident)
    # p_ref:     (Kp, TM)    bf16 im2col patches, M-tile on the lane axis
    # shift_ref: (Cout, 1)   f32  = (bias - mean) * scale + beta (resident)
    # o_ref:     (Cout, TM)  lane-dense output tile (f32 or bf16)
    acc = jnp.dot(w_ref[...], p_ref[...], preferred_element_type=jnp.float32)
    o_ref[...] = jnp.maximum(acc + shift_ref[...], 0.0).astype(o_ref.dtype)


def _cdiv(a, b):
    return -(-a // b)


def _round_up(v, m):
    return _cdiv(v, m) * m


def _im2col_cm(x_cnhw, k, stride, pad):
    """Channel-major im2col.

    Input x in (C, N, H, W); output patches (K, M) with
      K index = c*k*k + kh*k + kw   (matches W.reshape(Cout, Cin*k*k))
      M index = n*Ho*Wo + ho*Wo + wo
    """
    C, N, H, W = x_cnhw.shape
    Ho = (H + 2 * pad - k) // stride + 1
    Wo = (W + 2 * pad - k) // stride + 1
    xp = jnp.pad(x_cnhw, ((0, 0), (0, 0), (pad, pad), (pad, pad)))
    taps = []
    for i in range(k):
        for j in range(k):
            taps.append(xp[:, :, i:i + stride * Ho:stride, j:j + stride * Wo:stride])
    patches = jnp.stack(taps, axis=1).reshape(C * k * k, N * Ho * Wo)
    return patches, Ho, Wo


def conv_bn_relu_cm(x_cnhw, W, b, gamma, beta, run_mean, run_var,
                    *, stride=2, pad=1, eps=1e-5, out_dtype=jnp.float32):
    """Conv2d(3x3, stride, pad) + BatchNorm2d (eval stats) + ReLU.

    Channel-major in/out: (Cin, N, H, W) -> (Cout, N, Ho, Wo).
    """
    Cin, N, H, Win = x_cnhw.shape
    Cout, _, kh, kw = W.shape

    patches, Ho, Wo = _im2col_cm(x_cnhw, kh, stride, pad)        # (K, M)
    K, M = patches.shape

    # Fold BN into the weights / a single shift vector.
    scale = gamma / jnp.sqrt(run_var + eps)                      # (Cout,)
    w_mat = W.reshape(Cout, Cin * kh * kw).astype(jnp.float32) * scale[:, None]
    shift = ((b - run_mean) * scale + beta).reshape(Cout, 1).astype(jnp.float32)

    # Pad K to the bf16 sublane packing (zero rows -> no math change).
    K_pad = _round_up(K, 16)
    w_bf16 = jnp.pad(w_mat, ((0, 0), (0, K_pad - K))).astype(jnp.bfloat16)

    # Balanced, 128-aligned M tiles (lane axis of the output); pad M so every
    # tile is full -> unmasked lane-dense stores.
    MAX_TM = 2048
    n_tiles = _cdiv(M, MAX_TM)
    TM = _round_up(_cdiv(M, n_tiles), 128)
    M_pad = _round_up(M, TM)
    n_tiles = M_pad // TM

    patches_bf16 = jnp.pad(
        patches.astype(jnp.bfloat16), ((0, K_pad - K), (0, M_pad - M)))

    out_flat = pl.pallas_call(
        _conv_bn_relu_kernel,
        out_shape=jax.ShapeDtypeStruct((Cout, M_pad), out_dtype),
        grid=(n_tiles,),
        in_specs=[
            pl.BlockSpec((Cout, K_pad), lambda i: (0, 0)),  # weights: resident
            pl.BlockSpec((K_pad, TM), lambda i: (0, i)),    # patches: streamed
            pl.BlockSpec((Cout, 1), lambda i: (0, 0)),      # shift:   resident
        ],
        out_specs=pl.BlockSpec((Cout, TM), lambda i: (0, i)),
        compiler_params=pltpu.CompilerParams(
            dimension_semantics=("parallel",)),
    )(w_bf16, patches_bf16, shift)

    # (Cout, M_pad) -> drop pad -> (Cout, N, Ho, Wo)  (stay channel-major)
    return out_flat[:, :M].reshape(Cout, N, Ho, Wo)


# ----------------------------------------------------------------------------
# ENet forward (two conv-bn-relu blocks), deterministic synthetic parameters
# ----------------------------------------------------------------------------
def init_params(key):
    ks = jax.random.split(key, 12)

    def conv_p(k_w, k_b, cout, cin):
        w = jax.random.normal(k_w, (cout, cin, 3, 3), jnp.float32) * 0.1
        b = jax.random.normal(k_b, (cout,), jnp.float32) * 0.05
        return w, b

    def bn_p(k_g, k_b, k_m, k_v, c):
        gamma = 1.0 + 0.1 * jax.random.normal(k_g, (c,), jnp.float32)
        beta = 0.05 * jax.random.normal(k_b, (c,), jnp.float32)
        mean = 0.05 * jax.random.normal(k_m, (c,), jnp.float32)
        var = jnp.abs(jax.random.normal(k_v, (c,), jnp.float32)) * 0.1 + 0.9
        return gamma, beta, mean, var

    p = {}
    p["w1"], p["b1"] = conv_p(ks[0], ks[1], 16, 3)
    p["g1"], p["be1"], p["m1"], p["v1"] = bn_p(ks[2], ks[3], ks[4], ks[5], 16)
    p["w2"], p["b2"] = conv_p(ks[6], ks[7], 64, 16)
    p["g2"], p["be2"], p["m2"], p["v2"] = bn_p(ks[8], ks[9], ks[10], ks[11], 64)
    return p


def enet_forward(x_nchw, p):
    # NCHW -> channel-major (C, N, H, W) once at the entry.
    xc = jnp.transpose(x_nchw, (1, 0, 2, 3))
    # Intermediate activations as bf16 (they feed the bf16 MXU of block 2
    # anyway) -> halves the inter-layer HBM traffic.
    xc = conv_bn_relu_cm(xc, p["w1"], p["b1"], p["g1"], p["be1"], p["m1"],
                         p["v1"], out_dtype=jnp.bfloat16)
    xc = conv_bn_relu_cm(xc, p["w2"], p["b2"], p["g2"], p["be2"], p["m2"],
                         p["v2"], out_dtype=jnp.float32)
    # channel-major -> NCHW once at the exit.
    return jnp.transpose(xc, (1, 0, 2, 3))


# Pure-JAX reference (same semantics) for a correctness check.
def _ref_block(x, W, b, gamma, beta, mean, var, eps=1e-5):
    y = lax.conv_general_dilated(
        x, W, window_strides=(2, 2), padding=((1, 1), (1, 1)),
        dimension_numbers=("NCHW", "OIHW", "NCHW"))
    y = y + b[None, :, None, None]
    y = (y - mean[None, :, None, None]) / jnp.sqrt(var[None, :, None, None] + eps)
    y = y * gamma[None, :, None, None] + beta[None, :, None, None]
    return jnp.maximum(y, 0.0)


def enet_reference(x, p):
    x = _ref_block(x, p["w1"], p["b1"], p["g1"], p["be1"], p["m1"], p["v1"])
    x = _ref_block(x, p["w2"], p["b2"], p["g2"], p["be2"], p["m2"], p["v2"])
    return x


if __name__ == "__main__":
    key = jax.random.PRNGKey(0)
    k_x, k_p = jax.random.split(key)

    # Conv2d expects 3 input channels (module spec).
    x = jax.random.normal(k_x, (2, 3, 16, 16), jnp.float32)   # NCHW
    params = init_params(k_p)

    fwd = jax.jit(enet_forward)
    out = jax.block_until_ready(fwd(x, params))
    assert out.shape == (2, 64, 4, 4), out.shape

    ref = jax.block_until_ready(enet_reference(x, params))
    max_err = float(jnp.max(jnp.abs(out - ref)))
    # bf16 MXU operands / bf16 inter-layer activation with f32 accumulation.
    assert jnp.allclose(out, ref, atol=2e-2, rtol=2e-2), max_err

    print("KERNEL_OK")
</pallas_src>

<mosaic_0001>
module attributes {stable_mosaic.version = 11 : i64} {
  func.func @_conv_bn_relu_kernel(%arg0: i32, %arg1: memref<16x32xbf16, #tpu.memory_space<vmem>>, %arg2: memref<32x128xbf16, #tpu.memory_space<vmem>>, %arg3: memref<16x1xf32, #tpu.memory_space<vmem>>, %arg4: memref<16x128xbf16, #tpu.memory_space<vmem>>) attributes {dimension_semantics = [#tpu.dimension_semantics<parallel>], iteration_bounds = array<i64: 1>, scalar_prefetch = 0 : i64, scratch_operands = 0 : i64, tpu.core_type = #tpu.core_type<tc>, window_params = [{pipeline_mode = #tpu.pipeline_mode<synchronous>, transform_indices = @transform_0, window_bounds = array<i64: 16, 32>}, {transform_indices = @transform_1, window_bounds = array<i64: 32, 128>}, {pipeline_mode = #tpu.pipeline_mode<synchronous>, transform_indices = @transform_2, window_bounds = array<i64: 16, 1>}, {transform_indices = @transform_3, window_bounds = array<i64: 16, 128>}]} {
    %c0 = arith.constant 0 : index
    %c0_0 = arith.constant 0 : index
    %0 = vector.load %arg1[%c0, %c0_0] : memref<16x32xbf16, #tpu.memory_space<vmem>>, vector<16x32xbf16>
    %c0_1 = arith.constant 0 : index
    %c0_2 = arith.constant 0 : index
    %1 = vector.load %arg2[%c0_1, %c0_2] : memref<32x128xbf16, #tpu.memory_space<vmem>>, vector<32x128xbf16>
    %cst = arith.constant dense<0.000000e+00> : vector<16x128xf32>
    %2 = tpu.matmul %0, %1, %cst {dimension_numbers = #tpu.dot_dimension_numbers<[1], [0], [0], [1], [0, 0, 1, 1], [], []>} : vector<16x32xbf16>, vector<32x128xbf16>, vector<16x128xf32> -> vector<16x128xf32>
    %c0_3 = arith.constant 0 : index
    %c0_4 = arith.constant 0 : index
    %3 = vector.load %arg3[%c0_3, %c0_4] : memref<16x1xf32, #tpu.memory_space<vmem>>, vector<16x1xf32>
    %4 = vector.broadcast %3 : vector<16x1xf32> to vector<16x128xf32>
    %5 = arith.addf %2, %4 : vector<16x128xf32>
    %cst_5 = arith.constant 0.000000e+00 : f32
    %6 = vector.broadcast %cst_5 : f32 to vector<16x128xf32>
    %7 = arith.maximumf %5, %6 : vector<16x128xf32>
    %8 = arith.truncf %7 : vector<16x128xf32> to vector<16x128xbf16>
    %c0_6 = arith.constant 0 : index
    %c0_7 = arith.constant 0 : index
    %9 = vector.load %arg4[%c0_6, %c0_7] : memref<16x128xbf16, #tpu.memory_space<vmem>>, vector<16x128xbf16>
    tpu.vector_store %arg4[%c0_6, %c0_7], %8 {strides = array<i32>} : memref<16x128xbf16, #tpu.memory_space<vmem>>, vector<16x128xbf16>,
    return
  }
  func.func @transform_0(%arg0: i32) -> (i32, i32) {
    %c0_i32 = arith.constant 0 : i32
    %c0_i32_0 = arith.constant 0 : i32
    %c0_i32_1 = arith.constant 0 : i32
    return %c0_i32, %c0_i32_0 : i32, i32
  }
  func.func @transform_1(%arg0: i32) -> (i32, i32) {
    %c0_i32 = arith.constant 0 : i32
    %c0_i32_0 = arith.constant 0 : i32
    return %c0_i32, %arg0 : i32, i32
  }
  func.func @transform_2(%arg0: i32) -> (i32, i32) {
    %c0_i32 = arith.constant 0 : i32
    %c0_i32_0 = arith.constant 0 : i32
    %c0_i32_1 = arith.constant 0 : i32
    return %c0_i32, %c0_i32_0 : i32, i32
  }
  func.func @transform_3(%arg0: i32) -> (i32, i32) {
    %c0_i32 = arith.constant 0 : i32
    %c0_i32_0 = arith.constant 0 : i32
    return %c0_i32, %arg0 : i32, i32
  }
}

module attributes {stable_mosaic.version = 11 : i64} {
  func.func @_conv_bn_relu_kernel(%arg0: i32, %arg1: memref<64x144xbf16, #tpu.memory_space<vmem>>, %arg2: memref<144x128xbf16, #tpu.memory_space<vmem>>, %arg3: memref<64x1xf32, #tpu.memory_space<vmem>>, %arg4: memref<64x128xf32, #tpu.memory_space<vmem>>) attributes {dimension_semantics = [#tpu.dimension_semantics<parallel>], iteration_bounds = array<i64: 1>, scalar_prefetch = 0 : i64, scratch_operands = 0 : i64, tpu.core_type = #tpu.core_type<tc>, window_params = [{pipeline_mode = #tpu.pipeline_mode<synchronous>, transform_indices = @transform_0, window_bounds = array<i64: 64, 144>}, {transform_indices = @transform_1, window_bounds = array<i64: 144, 128>}, {pipeline_mode = #tpu.pipeline_mode<synchronous>, transform_indices = @transform_2, window_bounds = array<i64: 64, 1>}, {transform_indices = @transform_3, window_bounds = array<i64: 64, 128>}]} {
    %c0 = arith.constant 0 : index
    %c0_0 = arith.constant 0 : index
    %0 = vector.load %arg1[%c0, %c0_0] : memref<64x144xbf16, #tpu.memory_space<vmem>>, vector<64x144xbf16>
    %c0_1 = arith.constant 0 : index
    %c0_2 = arith.constant 0 : index
    %1 = vector.load %arg2[%c0_1, %c0_2] : memref<144x128xbf16, #tpu.memory_space<vmem>>, vector<144x128xbf16>
    %cst = arith.constant dense<0.000000e+00> : vector<64x128xf32>
    %2 = tpu.matmul %0, %1, %cst {dimension_numbers = #tpu.dot_dimension_numbers<[1], [0], [0], [1], [0, 0, 1, 1], [], []>} : vector<64x144xbf16>, vector<144x128xbf16>, vector<64x128xf32> -> vector<64x128xf32>
    %c0_3 = arith.constant 0 : index
    %c0_4 = arith.constant 0 : index
    %3 = vector.load %arg3[%c0_3, %c0_4] : memref<64x1xf32, #tpu.memory_space<vmem>>, vector<64x1xf32>
    %4 = vector.broadcast %3 : vector<64x1xf32> to vector<64x128xf32>
    %5 = arith.addf %2, %4 : vector<64x128xf32>
    %cst_5 = arith.constant 0.000000e+00 : f32
    %6 = vector.broadcast %cst_5 : f32 to vector<64x128xf32>
    %7 = arith.maximumf %5, %6 : vector<64x128xf32>
    %c0_6 = arith.constant 0 : index
    %c0_7 = arith.constant 0 : index
    %8 = vector.load %arg4[%c0_6, %c0_7] : memref<64x128xf32, #tpu.memory_space<vmem>>, vector<64x128xf32>
    tpu.vector_store %arg4[%c0_6, %c0_7], %7 {strides = array<i32>} : memref<64x128xf32, #tpu.memory_space<vmem>>, vector<64x128xf32>,
    return
  }
  func.func @transform_0(%arg0: i32) -> (i32, i32) {
    %c0_i32 = arith.constant 0 : i32
    %c0_i32_0 = arith.constant 0 : i32
    %c0_i32_1 = arith.constant 0 : i32
    return %c0_i32, %c0_i32_0 : i32, i32
  }
  func.func @transform_1(%arg0: i32) -> (i32, i32) {
    %c0_i32 = arith.constant 0 : i32
    %c0_i32_0 = arith.constant 0 : i32
    return %c0_i32, %arg0 : i32, i32
  }
  func.func @transform_2(%arg0: i32) -> (i32, i32) {
    %c0_i32 = arith.constant 0 : i32
    %c0_i32_0 = arith.constant 0 : i32
    %c0_i32_1 = arith.constant 0 : i32
    return %c0_i32, %c0_i32_0 : i32, i32
  }
  func.func @transform_3(%arg0: i32) -> (i32, i32) {
    %c0_i32 = arith.constant 0 : i32
    %c0_i32_0 = arith.constant 0 : i32
    return %c0_i32, %arg0 : i32, i32
  }
}

</mosaic_0001>

<llo_original>
// kernel: enet_forward.2
$region0: #{enet_forward.2}
  #allocation0 [shape = 'u32[]', space=smem, size = 0x4, offset = 0x4, fixed_abs, tag = 'smem constant byte address 0x4 - core index']
  #allocation1 [shape = 'u32[144,128]{1,0:T(1,128)}', space=vmem, size = 0x12000, scoped, tag = 'internal scratch']
  %s0 = inlined_call_operand.vmem [shape: bf16[16,32], index: 0, kind: input, shape index: {}]
  %s1 = inlined_call_operand.vmem [shape: bf16[32,128], index: 1, kind: input, shape index: {}]
  %s2 = inlined_call_operand.vmem [shape: f32[16,1], index: 2, kind: input, shape index: {}]
  %s3 = inlined_call_operand.vmem [shape: bf16[16,128], index: 3, kind: output, shape index: {}]
  %s4 = sld [smem:[#allocation0]]
  $region22: #{enet_forward.2} parent=0
    _
  %s6 = ssub.s32 1, %s4
  %s7 = scalar_select 0, %s6, %s4
  // Predicated region
  $region2: #{enet_forward.2} parent=0 // pred_check
    _
  $region3: #{enet_forward.2} parent=0 // pred_check_branch
    %9 = sbr.rel (0) target = $region5
  $region4: #{enet_forward.2} parent=0 // pred_region
    _
  $region5: #{enet_forward.2} parent=0 // pred_fallthru
    _
  // Predicated region
  $region6: #{enet_forward.2} parent=0 // pred_check
    _
  $region7: #{enet_forward.2} parent=0 // pred_check_branch
    %11 = sbr.rel (0) target = $region9
  $region8: #{enet_forward.2} parent=0 // pred_region
    _
  $region9: #{enet_forward.2} parent=0 // pred_fallthru
    _
  // Predicated region
  $region10: #{enet_forward.2} parent=0 // pred_check
    _
  $region11: #{enet_forward.2} parent=0 // pred_check_branch
    %13 = sbr.rel (0) target = $region13
  $region12: #{enet_forward.2} parent=0 // pred_region
    _
  $region13: #{enet_forward.2} parent=0 // pred_fallthru
    _
  %v15 = vld [vmem:[%s0] sm:$0xf]
  %v16 = vld [vmem:[%s0 + $0x4] sm:$0xf]
  %v17 = vld [vmem:[%s1] sm:$0xf]
  %v18 = vld [vmem:[%s1 + $0x4] sm:$0xf]
  %v19 = vld [vmem:[%s1 + $0x8] sm:$0xf]
  %v20 = vld [vmem:[%s1 + $0xc] sm:$0xf]
  %v21 = vld [vmem:[%s2] sm:$0xff]
  %v22 = vld [vmem:[%s2 + $0x8] sm:$0xff]
  %24 = vset.pattern.permute.xlu0 0
  %25 = vperm.xlu0 %24, %v21
  %v26 = vpop.permute.xlu0 %25
  %29 = vset.pattern.permute.xlu0 0
  %30 = vperm.xlu0 %29, %v22
  %v31 = vpop.permute.xlu0 %30
  %v35 = vunpack.c.l.b16 %v15
  %v36 = vunpack.c.l.b16 %v16
  %v37 = vpack.c.b16 %v36, %v35
  %v42 = vunpack.c.l.b16 %v17
  %v43 = vunpack.c.l.b16 %v18
  %v44 = vunpack.c.l.b16 %v19
  %v45 = vunpack.c.l.b16 %v20
  %v46 = vpack.c.b16 %v43, %v42
  %v47 = vpack.c.b16 %v45, %v44
  %vm50 = vcmask 261120
  %v52 = vsel %vm50, %v37, 0
  %54 = vmatprep.subr.bf16.mxu0 0
  %55 = vmatpush1.bf16.msra.mxu0 0
  %56 = vmatprep.subr.bf16.mxu0 0
  %57 = vmatpush1.bf16.msra.mxu0 0
  %58 = vmatprep.subr.bf16.mxu0 0
  %59 = vmatpush1.bf16.msra.mxu0 0
  %60 = vmatprep.subr.bf16.mxu0 0
  %61 = vmatpush1.bf16.msra.mxu0 0
  %62 = vmatprep.subr.bf16.mxu0 0
  %63 = vmatpush1.bf16.msra.mxu0 0
  %64 = vmatprep.subr.bf16.mxu0 0
  %65 = vmatpush1.bf16.msra.mxu0 0
  %66 = vmatprep.subr.bf16.mxu0 0
  %67 = vmatpush1.bf16.msra.mxu0 %v47
  %68 = vmatprep.subr.bf16.mxu0 0
  %69 = vmatpush1.bf16.msra.mxu0 %v46
  %70 = vmatprep.subr.bf16.mxu0 0
  %71 = vmatpush2.bf16.msra.mxu0 0
  %72 = vmatprep.subr.bf16.mxu0 0
  %73 = vmatpush2.bf16.msra.mxu0 0
  %74 = vmatprep.subr.bf16.mxu0 0
  %75 = vmatpush2.bf16.msra.mxu0 0
  %76 = vmatprep.subr.bf16.mxu0 0
  %77 = vmatpush2.bf16.msra.mxu0 0
  %78 = vmatprep.subr.bf16.mxu0 0
  %79 = vmatpush2.bf16.msra.mxu0 0
  %80 = vmatprep.subr.bf16.mxu0 0
  %81 = vmatpush2.bf16.msra.mxu0 0
  %82 = vmatprep.subr.bf16.mxu0 0
  %83 = vmatpush2.bf16.msra.mxu0 0
  %84 = vmatprep.subr.bf16.mxu0 0
  %85 = vmatpush2.bf16.msra.mxu0 0
  %86 = vmatprep.mubr.bf16.mxu0 0
  %87 = vmatmul.mubr.bf16.gmra.mxu0 %v52
  %v88 = vpop.f32.mrf.mxu0
  %v89 = vadd.f32 %v26, %v88
  %v90 = vpop.f32.mrf.mxu0
  %v91 = vpop.f32.mrf.mxu0
  %v92 = vadd.f32 %v31, %v91
  %v93 = vpop.f32.mrf.mxu0
  %94 = vdwg.mxu0
  %v95 = vmax.f32 %v89, 0.0
  %v96 = vmax.f32 %v92, 0.0
  %v97 = vpack.c.bf16 %v96, %v95
  %v99 = vunpack.c.l.b16 %v97
  %v100 = vunpack.c.h.b16 %v97
  %v101 = vpack.c.b16 %v99, %v99
  %v102 = vpack.c.b16 %v100, %v100
  %105 = vst [vmem:[%s3] sm:$0xf] %v101
  %106 = vst [vmem:[%s3 + $0x4] sm:$0xf] %v102
  // Predicated region
  $region14: #{enet_forward.2} parent=0 // pred_check
    _
  $region15: #{enet_forward.2} parent=0 // pred_check_branch
    %108 = sbr.rel (0) target = $region17
  $region16: #{enet_forward.2} parent=0 // pred_region
    _
  $region17: #{enet_forward.2} parent=0 // pred_fallthru
    _
  // Predicated region
  $region18: #{enet_forward.2} parent=0 // pred_check
    _
  $region19: #{enet_forward.2} parent=0 // pred_check_branch
    %110 = sbr.rel (0) target = $region21
  $region20: #{enet_forward.2} parent=0 // pred_region
    _
  $region21: #{enet_forward.2} parent=0 // pred_fallthru
    _

// kernel: enet_forward.3
$region0: #{enet_forward.3}
  #allocation0 [shape = 'u32[]', space=smem, size = 0x4, offset = 0x4, fixed_abs, tag = 'smem constant byte address 0x4 - core index']
  #allocation1 [shape = 'u32[144,128]{1,0:T(1,128)}', space=vmem, size = 0x12000, scoped, tag = 'internal scratch']
  %s0 = inlined_call_operand.vmem [shape: bf16[64,144], index: 0, kind: input, shape index: {}]
  %s1 = inlined_call_operand.vmem [shape: bf16[144,128], index: 1, kind: input, shape index: {}]
  %s2 = inlined_call_operand.vmem [shape: f32[64,1], index: 2, kind: input, shape index: {}]
  %s3 = inlined_call_operand.vmem [shape: f32[64,128], index: 3, kind: output, shape index: {}]
  %s4 = sld [smem:[#allocation0]]
  $region22: #{enet_forward.3} parent=0
    _
  %s6 = ssub.s32 1, %s4
  %s7 = scalar_select 0, %s6, %s4
  // Predicated region
  $region2: #{enet_forward.3} parent=0 // pred_check
    _
  $region3: #{enet_forward.3} parent=0 // pred_check_branch
    %9 = sbr.rel (0) target = $region5
  $region4: #{enet_forward.3} parent=0 // pred_region
    _
  $region5: #{enet_forward.3} parent=0 // pred_fallthru
    _
  // Predicated region
  $region6: #{enet_forward.3} parent=0 // pred_check
    _
  $region7: #{enet_forward.3} parent=0 // pred_check_branch
    %11 = sbr.rel (0) target = $region9
  $region8: #{enet_forward.3} parent=0 // pred_region
    _
  $region9: #{enet_forward.3} parent=0 // pred_fallthru
    _
  // Predicated region
  $region10: #{enet_forward.3} parent=0 // pred_check
    _
  $region11: #{enet_forward.3} parent=0 // pred_check_branch
    %13 = sbr.rel (0) target = $region13
  $region12: #{enet_forward.3} parent=0 // pred_region
    _
  $region13: #{enet_forward.3} parent=0 // pred_fallthru
    _
  %v15 = vld [vmem:[%s0] sm:$0xff]
  %v16 = vld [vmem:[%s0 + $0x8] sm:$0xff]
  %v17 = vld [vmem:[%s0 + $0x10] sm:$0xff]
  %v18 = vld [vmem:[%s0 + $0x18] sm:$0xff]
  %v19 = vld [vmem:[%s0 + $0x20] sm:$0xff]
  %v20 = vld [vmem:[%s0 + $0x28] sm:$0xff]
  %v21 = vld [vmem:[%s0 + $0x30] sm:$0xff]
  %v22 = vld [vmem:[%s0 + $0x38] sm:$0xff]
  %v23 = vld [vmem:[%s1] sm:$0xf]
  %v24 = vld [vmem:[%s1 + $0x4] sm:$0xf]
  %v25 = vld [vmem:[%s1 + $0x8] sm:$0xf]
  %v26 = vld [vmem:[%s1 + $0xc] sm:$0xf]
  %v27 = vld [vmem:[%s1 + $0x10] sm:$0xf]
  %v28 = vld [vmem:[%s1 + $0x14] sm:$0xf]
  %v29 = vld [vmem:[%s1 + $0x18] sm:$0xf]
  %v30 = vld [vmem:[%s1 + $0x1c] sm:$0xf]
  %v31 = vld [vmem:[%s1 + $0x20] sm:$0xf]
  %v32 = vld [vmem:[%s1 + $0x24] sm:$0xf]
  %v33 = vld [vmem:[%s1 + $0x28] sm:$0xf]
  %v34 = vld [vmem:[%s1 + $0x2c] sm:$0xf]
  %v35 = vld [vmem:[%s1 + $0x30] sm:$0xf]
  %v36 = vld [vmem:[%s1 + $0x34] sm:$0xf]
  %v37 = vld [vmem:[%s1 + $0x38] sm:$0xf]
  %v38 = vld [vmem:[%s1 + $0x3c] sm:$0xf]
  %v39 = vld [vmem:[%s1 + $0x40] sm:$0xf]
  %v40 = vld [vmem:[%s1 + $0x44] sm:$0xf]
  %v41 = vld [vmem:[%s2] sm:$0xff]
  %v42 = vld [vmem:[%s2 + $0x8] sm:$0xff]
  %v43 = vld [vmem:[%s2 + $0x10] sm:$0xff]
  %v44 = vld [vmem:[%s2 + $0x18] sm:$0xff]
  %v45 = vld [vmem:[%s2 + $0x20] sm:$0xff]
  %v46 = vld [vmem:[%s2 + $0x28] sm:$0xff]
  %v47 = vld [vmem:[%s2 + $0x30] sm:$0xff]
  %v48 = vld [vmem:[%s2 + $0x38] sm:$0xff]
  %50 = vset.pattern.permute.xlu0 0
  %51 = vperm.xlu0 %50, %v41
  %v52 = vpop.permute.xlu0 %51
  %55 = vset.pattern.permute.xlu0 0
  %56 = vperm.xlu0 %55, %v42
  %v57 = vpop.permute.xlu0 %56
  %60 = vset.pattern.permute.xlu0 0
  %61 = vperm.xlu0 %60, %v43
  %v62 = vpop.permute.xlu0 %61
  %65 = vset.pattern.permute.xlu0 0
  %66 = vperm.xlu0 %65, %v44
  %v67 = vpop.permute.xlu0 %66
  %70 = vset.pattern.permute.xlu0 0
  %71 = vperm.xlu0 %70, %v45
  %v72 = vpop.permute.xlu0 %71
  %75 = vset.pattern.permute.xlu0 0
  %76 = vperm.xlu0 %75, %v46
  %v77 = vpop.permute.xlu0 %76
  %80 = vset.pattern.permute.xlu0 0
  %81 = vperm.xlu0 %80, %v47
  %v82 = vpop.permute.xlu0 %81
  %85 = vset.pattern.permute.xlu0 0
  %86 = vperm.xlu0 %85, %v48
  %v87 = vpop.permute.xlu0 %86
  %v97 = vunpack.c.l.b16 %v15
  %v98 = vunpack.c.h.b16 %v15
  %v99 = vunpack.c.l.b16 %v16
  %v100 = vunpack.c.h.b16 %v16
  %v101 = vunpack.c.l.b16 %v17
  %v102 = vunpack.c.h.b16 %v17
  %v103 = vunpack.c.l.b16 %v18
  %v104 = vunpack.c.h.b16 %v18
  %v105 = vunpack.c.l.b16 %v19
  %v106 = vunpack.c.h.b16 %v19
  %v107 = vunpack.c.l.b16 %v20
  %v108 = vunpack.c.h.b16 %v20
  %v109 = vunpack.c.l.b16 %v21
  %v110 = vunpack.c.h.b16 %v21
  %v111 = vunpack.c.l.b16 %v22
  %v112 = vunpack.c.h.b16 %v22
  %v113 = vpack.c.b16 %v99, %v97
  %v114 = vpack.c.b16 %v100, %v98
  %v115 = vpack.c.b16 %v103, %v101
  %v116 = vpack.c.b16 %v104, %v102
  %v117 = vpack.c.b16 %v107, %v105
  %v118 = vpack.c.b16 %v108, %v106
  %v119 = vpack.c.b16 %v111, %v109
  %v120 = vpack.c.b16 %v112, %v110
  %v143 = vunpack.c.l.b16 %v23
  %v144 = vunpack.c.l.b16 %v24
  %v145 = vunpack.c.l.b16 %v25
  %v146 = vunpack.c.l.b16 %v26
  %v147 = vunpack.c.l.b16 %v27
  %v148 = vunpack.c.l.b16 %v28
  %v149 = vunpack.c.l.b16 %v29
  %v150 = vunpack.c.l.b16 %v30
  %v151 = vunpack.c.l.b16 %v31
  %v152 = vunpack.c.l.b16 %v32
  %v153 = vunpack.c.l.b16 %v33
  %v154 = vunpack.c.l.b16 %v34
  %v155 = vunpack.c.l.b16 %v35
  %v156 = vunpack.c.l.b16 %v36
  %v157 = vunpack.c.l.b16 %v37
  %v158 = vunpack.c.l.b16 %v38
  %v159 = vunpack.c.l.b16 %v39
  %v160 = vunpack.c.l.b16 %v40
  %v161 = vpack.c.b16 %v144, %v143
  %v162 = vpack.c.b16 %v146, %v145
  %v163 = vpack.c.b16 %v148, %v147
  %v164 = vpack.c.b16 %v150, %v149
  %v165 = vpack.c.b16 %v152, %v151
  %v166 = vpack.c.b16 %v154, %v153
  %v167 = vpack.c.b16 %v156, %v155
  %v168 = vpack.c.b16 %v158, %v157
  %v169 = vpack.c.b16 %v160, %v159
  %vm179 = vcmask 130048
  %v181 = vsel %vm179, %v114, 0
  %v184 = vsel %vm179, %v116, 0
  %v187 = vsel %vm179, %v118, 0
  %v190 = vsel %vm179, %v120, 0
  %192 = vmatprep.subr.bf16.mxu0 0
  %193 = vmatpush1.bf16.msra.mxu0 %v168
  %194 = vmatprep.subr.bf16.mxu0 0
  %195 = vmatpush1.bf16.msra.mxu0 %v167
  %196 = vmatprep.subr.bf16.mxu0 0
  %197 = vmatpush1.bf16.msra.mxu0 %v166
  %198 = vmatprep.subr.bf16.mxu0 0
  %199 = vmatpush1.bf16.msra.mxu0 %v165
  %200 = vmatprep.subr.bf16.mxu0 0
  %201 = vmatpush1.bf16.msra.mxu0 %v164
  %202 = vmatprep.subr.bf16.mxu0 0
  %203 = vmatpush1.bf16.msra.mxu0 %v163
  %204 = vmatprep.subr.bf16.mxu0 0
  %205 = vmatpush1.bf16.msra.mxu0 %v162
  %206 = vmatprep.subr.bf16.mxu0 0
  %207 = vmatpush1.bf16.msra.mxu0 %v161
  %208 = vmatprep.subr.bf16.mxu0 0
  %209 = vmatpush2.bf16.msra.mxu0 0
  %210 = vmatprep.subr.bf16.mxu0 0
  %211 = vmatpush2.bf16.msra.mxu0 0
  %212 = vmatprep.subr.bf16.mxu0 0
  %213 = vmatpush2.bf16.msra.mxu0 0
  %214 = vmatprep.subr.bf16.mxu0 0
  %215 = vmatpush2.bf16.msra.mxu0 0
  %216 = vmatprep.subr.bf16.mxu0 0
  %217 = vmatpush2.bf16.msra.mxu0 0
  %218 = vmatprep.subr.bf16.mxu0 0
  %219 = vmatpush2.bf16.msra.mxu0 0
  %220 = vmatprep.subr.bf16.mxu0 0
  %221 = vmatpush2.bf16.msra.mxu0 0
  %222 = vmatprep.subr.bf16.mxu0 0
  %223 = vmatpush2.bf16.msra.mxu0 %v169
  %224 = vmatprep.mubr.bf16.mxu0 %v181
  %225 = vmatmul.mubr.bf16.gmra.mxu0 %v113
  %v226 = vpop.f32.mrf.mxu0
  %v227 = vadd.f32 %v52, %v226
  %v228 = vpop.f32.mrf.mxu0
  %v229 = vpop.f32.mrf.mxu0
  %v230 = vadd.f32 %v57, %v229
  %v231 = vpop.f32.mrf.mxu0
  %232 = vmatprep.mubr.bf16.mxu0 %v184
  %233 = vmatmul.mubr.bf16.gmra.mxu0 %v115
  %v234 = vpop.f32.mrf.mxu0
  %v235 = vadd.f32 %v62, %v234
  %v236 = vpop.f32.mrf.mxu0
  %v237 = vpop.f32.mrf.mxu0
  %v238 = vadd.f32 %v67, %v237
  %v239 = vpop.f32.mrf.mxu0
  %240 = vmatprep.mubr.bf16.mxu0 %v187
  %241 = vmatmul.mubr.bf16.gmra.mxu0 %v117
  %v242 = vpop.f32.mrf.mxu0
  %v243 = vadd.f32 %v72, %v242
  %v244 = vpop.f32.mrf.mxu0
  %v245 = vpop.f32.mrf.mxu0
  %v246 = vadd.f32 %v77, %v245
  %v247 = vpop.f32.mrf.mxu0
  %248 = vmatprep.mubr.bf16.mxu0 %v190
  %249 = vmatmul.mubr.bf16.gmra.mxu0 %v119
  %v250 = vpop.f32.mrf.mxu0
  %v251 = vadd.f32 %v82, %v250
  %v252 = vpop.f32.mrf.mxu0
  %v253 = vpop.f32.mrf.mxu0
  %v254 = vadd.f32 %v87, %v253
  %v255 = vpop.f32.mrf.mxu0
  %256 = vdwg.mxu0
  %v257 = vmax.f32 %v227, 0.0
  %v258 = vmax.f32 %v230, 0.0
  %v259 = vmax.f32 %v235, 0.0
  %v260 = vmax.f32 %v238, 0.0
  %v261 = vmax.f32 %v243, 0.0
  %v262 = vmax.f32 %v246, 0.0
  %v263 = vmax.f32 %v251, 0.0
  %v264 = vmax.f32 %v254, 0.0
  %265 = vst [vmem:[%s3] sm:$0xff] %v257
  %266 = vst [vmem:[%s3 + $0x8] sm:$0xff] %v258
  %267 = vst [vmem:[%s3 + $0x10] sm:$0xff] %v259
  %268 = vst [vmem:[%s3 + $0x18] sm:$0xff] %v260
  %269 = vst [vmem:[%s3 + $0x20] sm:$0xff] %v261
  %270 = vst [vmem:[%s3 + $0x28] sm:$0xff] %v262
  %271 = vst [vmem:[%s3 + $0x30] sm:$0xff] %v263
  %272 = vst [vmem:[%s3 + $0x38] sm:$0xff] %v264
  // Predicated region
  $region14: #{enet_forward.3} parent=0 // pred_check
    _
  $region15: #{enet_forward.3} parent=0 // pred_check_branch
    %274 = sbr.rel (0) target = $region17
  $region16: #{enet_forward.3} parent=0 // pred_region
    _
  $region17: #{enet_forward.3} parent=0 // pred_fallthru
    _
  // Predicated region
  $region18: #{enet_forward.3} parent=0 // pred_check
    _
  $region19: #{enet_forward.3} parent=0 // pred_check_branch
    %276 = sbr.rel (0) target = $region21
  $region20: #{enet_forward.3} parent=0 // pred_region
    _
  $region21: #{enet_forward.3} parent=0 // pred_fallthru
    _

</llo_original>
